<compile_context>
chip_gen: v5e
topology: v5e:2x2
jax: 0.10.0
libtpu: 0.0.40
codegen_flags: <defaults>
</compile_context>

<pallas_src>
import functools
import math

import jax
import jax.numpy as jnp
from jax import lax
from jax.experimental import pallas as pl
from jax.experimental.pallas import tpu as pltpu


# ------------------------------ helpers ------------------------------------ #

def _round_up(v, m):
    return (v + m - 1) // m * m


def _softplus(z):
    # Numerically stable log(1 + exp(z)).
    return jnp.maximum(z, 0.0) + jnp.log1p(jnp.exp(-jnp.abs(z)))


def _vmem_limit_bytes(tb, tc, d, mm_bytes, emit_cos):
    # Per-step working set: x block + w block (matmul_dtype) + optional f32 cos
    # block + small per-row buffers, double-buffered, plus slack.  Clamped to
    # the physical VMEM of the current generation minus headroom (v7x: 64 MiB).
    step = mm_bytes * (tb * d + tc * d)
    if emit_cos:
        step += 4 * tb * tc
    step += 8 * tb
    want = 4 * step + (16 << 20)
    try:
        cap = pltpu.get_tpu_info().vmem_capacity_bytes
    except Exception:  # pragma: no cover - conservative fallback
        cap = 64 << 20
    return int(min(max(want, 32 << 20), cap - (8 << 20)))


# ------------------------------ kernels ------------------------------------ #

def _uce_loss_kernel(x_ref, w_ref, b_ref, label_ref, *out_refs,
                     m, s, l, tile_c, c_actual, has_pad, emit_cos):
    if emit_cos:
        cos_ref, loss_rows_ref = out_refs
    else:
        (loss_rows_ref,) = out_refs

    j = pl.program_id(1)                       # class-tile index (reduction axis)

    @pl.when(j == 0)
    def _init():
        loss_rows_ref[...] = jnp.zeros_like(loss_rows_ref)

    # cos[b, c] = sum_d x[b, d] * w_t[d, c] — native MXU feed, f32 accumulation.
    cos = lax.dot_general(x_ref[...], w_ref[...],
                          dimension_numbers=(((1,), (0,)), ((), ())),
                          preferred_element_type=jnp.float32)   # (TB, TC) f32
    if emit_cos:
        cos_ref[...] = cos.astype(cos_ref.dtype)

    bias = b_ref[0, 0]
    labels = label_ref[...]                    # (TB, 1) int32

    # Negative-class loss for the whole tile (masking of padded columns is
    # deferred to the last class tile only).
    z_n = jnp.clip(s * cos - bias, -s, s)
    n_loss = _softplus(z_n) * l                # (TB, TC)

    # Positive-class correction only where the label column lies in this tile:
    # replace n_loss(label) with p_loss(label).
    col = j * tile_c + lax.broadcasted_iota(jnp.int32, cos.shape, 1)
    one_hot = col == labels                    # (TB, TC) bool
    cos_lbl = jnp.sum(jnp.where(one_hot, cos, 0.0), axis=1, keepdims=True)
    in_tile = (labels >= j * tile_c) & (labels < (j + 1) * tile_c)

    z_p = jnp.clip(s * (cos_lbl - m) - bias, -s, s)
    p_lbl = _softplus(-z_p)
    n_lbl = _softplus(jnp.clip(s * cos_lbl - bias, -s, s)) * l
    corr = jnp.where(in_tile, p_lbl - n_lbl, 0.0)   # (TB, 1)
    # NOTE: padded batch rows carry label 0 and get a correction here; they are
    # sliced off in the wrapper before the mean, so this is harmless.

    if has_pad:
        last = pl.num_programs(1) - 1

        @pl.when(j == last)
        def _last_tile():                      # mask padded class columns
            masked = jnp.where(col < c_actual, n_loss, 0.0)
            loss_rows_ref[...] += jnp.sum(masked, axis=1, keepdims=True) + corr

        @pl.when(j != last)
        def _interior_tile():                  # fast path: no mask work
            loss_rows_ref[...] += jnp.sum(n_loss, axis=1, keepdims=True) + corr
    else:
        loss_rows_ref[...] += jnp.sum(n_loss, axis=1, keepdims=True) + corr


def _uce_cos_kernel(x_ref, w_ref, cos_ref):
    cos = lax.dot_general(x_ref[...], w_ref[...],
                          dimension_numbers=(((1,), (0,)), ((), ())),
                          preferred_element_type=jnp.float32)
    cos_ref[...] = cos.astype(cos_ref.dtype)


# ------------------------------ wrapper ------------------------------------ #

def unified_cross_entropy_loss(x, weight, bias, label=None, *,
                               m=0.4, s=64.0, l=1.0,
                               matmul_dtype=jnp.bfloat16,
                               return_cos=True,
                               tb_max=512, tc_max=512):
    """Mirrors Unified_Cross_Entropy_Loss.forward.

    x: (B, in_features) f32, weight: (out_features, in_features) f32,
    bias: (1,) f32, label: optional (B,) int.

    Returns (cos_theta,) if label is None;
            (cos_theta, loss) if label is given and return_cos=True;
            loss (scalar) if label is given and return_cos=False.

    NOTE: matmul_dtype defaults to bfloat16 (MXU operands; f32 accumulation).
    Pass jnp.float32 to match the PyTorch f32 reference bit-for-bit in the
    matmul; with s=64 bf16 cos error is amplified into the logits.
    """
    x = jnp.asarray(x, jnp.float32)
    weight = jnp.asarray(weight, jnp.float32)
    bias2 = jnp.asarray(bias, jnp.float32).reshape(1, 1)

    B, D = x.shape
    C, D2 = weight.shape
    assert D == D2

    # Tile sizes (multiples of 8 / 128 or the full padded extent).  Ensure at
    # least 2 batch tiles when possible so the "parallel" axis feeds both
    # TensorCores on v7x.
    TB = min(_round_up(tb_max, 8), _round_up(B, 8))
    if B > 8 and _round_up(B, TB) // TB < 2:
        TB = _round_up(-(-B // 2), 8)
    TC = min(_round_up(tc_max, 128), _round_up(C, 128))
    B_pad = _round_up(B, TB)
    C_pad = _round_up(C, TC)

    # ---- One-time hoisted work (plain XLA, not per grid step) ------------- #
    # Row-wise L2 normalization matching F.normalize(weight, eps=1e-05),
    # then transpose to (D, C) so the kernel's RHS contracting dim sits on the
    # sublane axis (native MXU feed), pad, and cast to matmul_dtype.
    norm = jnp.sqrt(jnp.sum(weight * weight, axis=1, keepdims=True))
    w_n = weight / jnp.maximum(norm, 1e-05)
    w_t = w_n.T                                                  # (D, C)
    if C_pad != C:
        w_t = jnp.pad(w_t, ((0, 0), (0, C_pad - C)))
    w_t = w_t.astype(matmul_dtype)

    x_p = x if B_pad == B else jnp.pad(x, ((0, B_pad - B), (0, 0)))
    x_p = x_p.astype(matmul_dtype)

    grid = (B_pad // TB, C_pad // TC)
    mm_bytes = jnp.dtype(matmul_dtype).itemsize

    if label is None:
        vmem_limit = _vmem_limit_bytes(TB, TC, D, mm_bytes, emit_cos=True)
        cos = pl.pallas_call(
            _uce_cos_kernel,
            out_shape=jax.ShapeDtypeStruct((B_pad, C_pad), jnp.float32),
            grid_spec=pltpu.PrefetchScalarGridSpec(
                num_scalar_prefetch=0,
                grid=grid,
                in_specs=[pl.BlockSpec((TB, D), lambda i, j: (i, 0)),
                          pl.BlockSpec((D, TC), lambda i, j: (0, j))],
                out_specs=pl.BlockSpec((TB, TC), lambda i, j: (i, j))),
            compiler_params=pltpu.CompilerParams(
                dimension_semantics=("parallel", "parallel"),
                vmem_limit_bytes=vmem_limit),
        )(x_p, w_t)
        return (cos[:B, :C],)

    label_p = jnp.asarray(label, jnp.int32).reshape(B)
    if B_pad != B:
        label_p = jnp.pad(label_p, (0, B_pad - B))
    label_p = label_p.reshape(B_pad, 1)

    kernel = functools.partial(_uce_loss_kernel,
                               m=float(m), s=float(s), l=float(l),
                               tile_c=TC, c_actual=C,
                               has_pad=(C_pad != C), emit_cos=return_cos)

    if return_cos:
        out_shape = (jax.ShapeDtypeStruct((B_pad, C_pad), jnp.float32),
                     jax.ShapeDtypeStruct((B_pad, 1), jnp.float32))
        out_specs = (pl.BlockSpec((TB, TC), lambda i, j: (i, j)),     # cos
                     pl.BlockSpec((TB, 1), lambda i, j: (i, 0)))      # loss acc
    else:
        out_shape = jax.ShapeDtypeStruct((B_pad, 1), jnp.float32)
        out_specs = pl.BlockSpec((TB, 1), lambda i, j: (i, 0))

    vmem_limit = _vmem_limit_bytes(TB, TC, D, mm_bytes, emit_cos=return_cos)

    result = pl.pallas_call(
        kernel,
        out_shape=out_shape,
        grid_spec=pltpu.PrefetchScalarGridSpec(
            num_scalar_prefetch=0,
            grid=grid,
            in_specs=[
                pl.BlockSpec((TB, D), lambda i, j: (i, 0)),   # x tile (matmul_dtype)
                pl.BlockSpec((D, TC), lambda i, j: (0, j)),   # w_t tile (matmul_dtype)
                pl.BlockSpec((1, 1), lambda i, j: (0, 0),
                             memory_space=pltpu.MemorySpace.SMEM),  # bias scalar
                pl.BlockSpec((TB, 1), lambda i, j: (i, 0)),   # labels
            ],
            out_specs=out_specs),
        compiler_params=pltpu.CompilerParams(
            dimension_semantics=("parallel", "arbitrary"),
            vmem_limit_bytes=vmem_limit),
    )(x_p, w_t, bias2, label_p)

    if return_cos:
        cos, loss_rows = result
        loss = jnp.mean(loss_rows[:B, 0])
        return cos[:B, :C], loss
    loss_rows = result
    return jnp.mean(loss_rows[:B, 0])


# --------------------------- parameter init --------------------------------- #

def init_params(key, in_features, out_features, r=1.0):
    # kaiming_normal_(a=1, mode='fan_in', nonlinearity='leaky_relu'):
    #   gain = sqrt(2 / (1 + a^2)) = 1, std = gain / sqrt(fan_in)
    std = 1.0 / math.sqrt(in_features)
    weight = std * jax.random.normal(key, (out_features, in_features), jnp.float32)
    bias = jnp.full((1,), math.log(out_features * r * 10.0), jnp.float32)
    return weight, bias


# ------------------------------ references ---------------------------------- #

def _loss_from_cos(cos, bias, label, num_classes, m, s, l):
    cmp = s * (cos - m) - bias[0]
    cmn = s * cos - bias[0]
    p_loss = jnp.log1p(jnp.exp(-jnp.clip(cmp, -s, s)))
    n_loss = jnp.log1p(jnp.exp(jnp.clip(cmn, -s, s))) * l
    one_hot = jax.nn.one_hot(label, num_classes, dtype=bool)
    return jnp.mean(jnp.sum(jnp.where(one_hot, p_loss, n_loss), axis=1))


def _reference_f32(x, weight, bias, label, m, s, l):
    w_n = weight / jnp.maximum(
        jnp.linalg.norm(weight, axis=1, keepdims=True), 1e-05)
    cos = x @ w_n.T
    return cos, _loss_from_cos(cos, bias, label, weight.shape[0], m, s, l)


def _reference_bf16(x, weight, bias, label, m, s, l):
    # Matches the kernel's bf16 operand path (normalize in f32, cast operands
    # to bf16, f32 accumulation).
    norm = jnp.sqrt(jnp.sum(weight * weight, axis=1, keepdims=True))
    w_n = (weight / jnp.maximum(norm, 1e-05)).astype(jnp.bfloat16)
    cos = lax.dot_general(x.astype(jnp.bfloat16), w_n,
                          dimension_numbers=(((1,), (1,)), ((), ())),
                          preferred_element_type=jnp.float32)
    return cos, _loss_from_cos(cos, bias, label, weight.shape[0], m, s, l)


# -------------------------------- main --------------------------------------- #

if __name__ == "__main__":
    m, s, l, r = 0.4, 64.0, 1.0, 1.0
    key = jax.random.PRNGKey(0)
    kx, kw, kl, kx2, kw2, kl2 = jax.random.split(key, 6)

    # ---- test 1: small shapes, f32 matmul operands, strict check ---- #
    B, D, C = 8, 32, 16
    x = jax.random.normal(kx, (B, D), jnp.float32)
    weight, bias = init_params(kw, D, C, r=r)
    label = jax.random.randint(kl, (B,), 0, C, jnp.int32)

    cos, loss = unified_cross_entropy_loss(x, weight, bias, label,
                                           m=m, s=s, l=l,
                                           matmul_dtype=jnp.float32)
    jax.block_until_ready((cos, loss))
    cos_ref, loss_ref = _reference_f32(x, weight, bias, label, m, s, l)
    assert jnp.allclose(cos, cos_ref, atol=1e-4, rtol=1e-4), "cos mismatch (f32)"
    assert jnp.allclose(loss, loss_ref, atol=1e-3, rtol=1e-3), "loss mismatch (f32)"

    # label=None inference path
    (cos_only,) = unified_cross_entropy_loss(x, weight, bias, None,
                                             matmul_dtype=jnp.float32)
    jax.block_until_ready(cos_only)
    assert jnp.allclose(cos_only, cos_ref, atol=1e-4, rtol=1e-4), "cos-only mismatch"

    # loss-only fast path (no cos writeback)
    loss_nc = unified_cross_entropy_loss(x, weight, bias, label,
                                         m=m, s=s, l=l,
                                         matmul_dtype=jnp.float32,
                                         return_cos=False)
    jax.block_until_ready(loss_nc)
    assert jnp.allclose(loss_nc, loss_ref, atol=1e-3, rtol=1e-3), "loss-only mismatch"

    # ---- test 2: padded + multi-tile grid (B=10->16, C=200->256, 2x2), f32 ---- #
    B2, D2, C2 = 10, 32, 200
    x2 = jax.random.normal(kx2, (B2, D2), jnp.float32)
    weight2, bias2 = init_params(kw2, D2, C2, r=r)
    label2 = jax.random.randint(kl2, (B2,), 0, C2, jnp.int32)

    cos2, loss2 = unified_cross_entropy_loss(x2, weight2, bias2, label2,
                                             m=m, s=s, l=l,
                                             matmul_dtype=jnp.float32,
                                             tb_max=8, tc_max=128)
    jax.block_until_ready((cos2, loss2))
    cos2_ref, loss2_ref = _reference_f32(x2, weight2, bias2, label2, m, s, l)
    assert jnp.allclose(cos2, cos2_ref, atol=1e-4, rtol=1e-4), "cos mismatch (tiled)"
    assert jnp.allclose(loss2, loss2_ref, atol=1e-3, rtol=1e-3), "loss mismatch (tiled)"

    # ---- test 3: default bf16 matmul operands, tiled, bf16-matched reference ---- #
    cos3, loss3 = unified_cross_entropy_loss(x2, weight2, bias2, label2,
                                             m=m, s=s, l=l,
                                             tb_max=8, tc_max=128)
    jax.block_until_ready((cos3, loss3))
    cos3_ref, loss3_ref = _reference_bf16(x2, weight2, bias2, label2, m, s, l)
    assert jnp.allclose(cos3, cos3_ref, atol=5e-3, rtol=5e-3), "cos mismatch (bf16)"
    assert jnp.allclose(loss3, loss3_ref, atol=1e-1, rtol=2e-2), "loss mismatch (bf16)"

    print("KERNEL_OK")
</pallas_src>

<mosaic_0001>
module attributes {stable_mosaic.version = 11 : i64} {
  func.func @_uce_loss_kernel(%arg0: i32, %arg1: i32, %arg2: memref<8x32xf32, #tpu.memory_space<vmem>>, %arg3: memref<32x128xf32, #tpu.memory_space<vmem>>, %arg4: memref<1x1xf32, #tpu.memory_space<smem>>, %arg5: memref<8x1xi32, #tpu.memory_space<vmem>>, %arg6: memref<8x128xf32, #tpu.memory_space<vmem>>, %arg7: memref<8x1xf32, #tpu.memory_space<vmem>>) attributes {dimension_semantics = [#tpu.dimension_semantics<parallel>, #tpu.dimension_semantics<arbitrary>], iteration_bounds = array<i64: 1, 1>, scalar_prefetch = 0 : i64, scratch_operands = 0 : i64, tpu.core_type = #tpu.core_type<tc>, window_params = [{transform_indices = @transform_0, window_bounds = array<i64: 8, 32>}, {transform_indices = @transform_1, window_bounds = array<i64: 32, 128>}, {transform_indices = @transform_2, window_bounds = array<i64: 1, 1>}, {transform_indices = @transform_3, window_bounds = array<i64: 8, 1>}, {transform_indices = @transform_4, window_bounds = array<i64: 8, 128>}, {transform_indices = @transform_5, window_bounds = array<i64: 8, 1>}]} {
    %c0_i32 = arith.constant 0 : i32
    %0 = arith.cmpi eq, %arg1, %c0_i32 : i32
    %1 = arith.extui %0 : i1 to i32
    %c0_i32_0 = arith.constant 0 : i32
    %2 = arith.cmpi ne, %1, %c0_i32_0 : i32
    scf.if %2 {
      %cst_38 = arith.constant 0.000000e+00 : f32
      %92 = vector.broadcast %cst_38 : f32 to vector<8x1xf32>
      %c0_39 = arith.constant 0 : index
      %c0_40 = arith.constant 0 : index
      %93 = vector.load %arg7[%c0_39, %c0_40] : memref<8x1xf32, #tpu.memory_space<vmem>>, vector<8x1xf32>
      tpu.vector_store %arg7[%c0_39, %c0_40], %92 {strides = array<i32>} : memref<8x1xf32, #tpu.memory_space<vmem>>, vector<8x1xf32>,
    } else {
    }
    %c0 = arith.constant 0 : index
    %c0_1 = arith.constant 0 : index
    %3 = vector.load %arg2[%c0, %c0_1] : memref<8x32xf32, #tpu.memory_space<vmem>>, vector<8x32xf32>
    %c0_2 = arith.constant 0 : index
    %c0_3 = arith.constant 0 : index
    %4 = vector.load %arg3[%c0_2, %c0_3] : memref<32x128xf32, #tpu.memory_space<vmem>>, vector<32x128xf32>
    %cst = arith.constant dense<0.000000e+00> : vector<8x128xf32>
    %5 = tpu.matmul %3, %4, %cst {dimension_numbers = #tpu.dot_dimension_numbers<[1], [0], [0], [1], [0, 0, 1, 1], [], []>} : vector<8x32xf32>, vector<32x128xf32>, vector<8x128xf32> -> vector<8x128xf32>
    %c0_4 = arith.constant 0 : index
    %c0_5 = arith.constant 0 : index
    %6 = vector.load %arg6[%c0_4, %c0_5] : memref<8x128xf32, #tpu.memory_space<vmem>>, vector<8x128xf32>
    tpu.vector_store %arg6[%c0_4, %c0_5], %5 {strides = array<i32>} : memref<8x128xf32, #tpu.memory_space<vmem>>, vector<8x128xf32>,
    %c0_6 = arith.constant 0 : index
    %c0_7 = arith.constant 0 : index
    %7 = memref.load %arg4[%c0_6, %c0_7] : memref<1x1xf32, #tpu.memory_space<smem>>
    %c0_8 = arith.constant 0 : index
    %c0_9 = arith.constant 0 : index
    %8 = vector.load %arg5[%c0_8, %c0_9] : memref<8x1xi32, #tpu.memory_space<vmem>>, vector<8x1xi32>
    %cst_10 = arith.constant 6.400000e+01 : f32
    %9 = vector.broadcast %cst_10 : f32 to vector<8x128xf32>
    %10 = arith.mulf %9, %5 : vector<8x128xf32>
    %11 = vector.broadcast %7 : f32 to vector<8x128xf32>
    %12 = arith.subf %10, %11 : vector<8x128xf32>
    %cst_11 = arith.constant -6.400000e+01 : f32
    %cst_12 = arith.constant 6.400000e+01 : f32
    %13 = vector.broadcast %cst_11 : f32 to vector<8x128xf32>
    %14 = arith.maximumf %13, %12 : vector<8x128xf32>
    %15 = vector.broadcast %cst_12 : f32 to vector<8x128xf32>
    %16 = arith.minimumf %15, %14 : vector<8x128xf32>
    %cst_13 = arith.constant 0.000000e+00 : f32
    %17 = vector.broadcast %cst_13 : f32 to vector<8x128xf32>
    %18 = arith.maximumf %16, %17 : vector<8x128xf32>
    %19 = math.absf %16 : vector<8x128xf32>
    %cst_14 = arith.constant 0.000000e+00 : f32
    %20 = vector.broadcast %cst_14 : f32 to vector<8x128xf32>
    %21 = arith.subf %20, %19 : vector<8x128xf32>
    %22 = math.exp %21 : vector<8x128xf32>
    %23 = math.log1p %22 : vector<8x128xf32>
    %24 = arith.addf %18, %23 : vector<8x128xf32>
    %cst_15 = arith.constant 1.000000e+00 : f32
    %25 = vector.broadcast %cst_15 : f32 to vector<8x128xf32>
    %26 = arith.mulf %24, %25 : vector<8x128xf32>
    %c128_i32 = arith.constant 128 : i32
    %27 = arith.muli %arg1, %c128_i32 : i32
    %28 = tpu.iota {dimensions = array<i32: 1>} : vector<8x128xi32>
    %29 = vector.broadcast %27 : i32 to vector<8x128xi32>
    %30 = arith.addi %29, %28 : vector<8x128xi32>
    %31 = vector.broadcast %8 : vector<8x1xi32> to vector<8x128xi32>
    %32 = arith.cmpi eq, %30, %31 : vector<8x128xi32>
    %cst_16 = arith.constant 0.000000e+00 : f32
    %33 = vector.broadcast %cst_16 : f32 to vector<8x128xf32>
    %34 = arith.select %32, %5, %33 : vector<8x128xi1>, vector<8x128xf32>
    %cst_17 = arith.constant dense<0.000000e+00> : vector<8xf32>
    %35 = vector.multi_reduction <add>, %34, %cst_17 [1] : vector<8x128xf32> to vector<8xf32>
    %36 = vector.shape_cast %35 : vector<8xf32> to vector<8x1xf32>
    %c128_i32_18 = arith.constant 128 : i32
    %37 = arith.muli %arg1, %c128_i32_18 : i32
    %38 = vector.broadcast %37 : i32 to vector<8x1xi32>
    %39 = arith.cmpi sge, %8, %38 : vector<8x1xi32>
    %c1_i32 = arith.constant 1 : i32
    %40 = arith.addi %arg1, %c1_i32 : i32
    %c128_i32_19 = arith.constant 128 : i32
    %41 = arith.muli %40, %c128_i32_19 : i32
    %42 = vector.broadcast %41 : i32 to vector<8x1xi32>
    %43 = arith.cmpi slt, %8, %42 : vector<8x1xi32>
    %44 = arith.andi %39, %43 : vector<8x1xi1>
    %cst_20 = arith.constant 4.000000e-01 : f32
    %45 = vector.broadcast %cst_20 : f32 to vector<8x1xf32>
    %46 = arith.subf %36, %45 : vector<8x1xf32>
    %cst_21 = arith.constant 6.400000e+01 : f32
    %47 = vector.broadcast %cst_21 : f32 to vector<8x1xf32>
    %48 = arith.mulf %47, %46 : vector<8x1xf32>
    %49 = vector.broadcast %7 : f32 to vector<8x1xf32>
    %50 = arith.subf %48, %49 : vector<8x1xf32>
    %cst_22 = arith.constant -6.400000e+01 : f32
    %cst_23 = arith.constant 6.400000e+01 : f32
    %51 = vector.broadcast %cst_22 : f32 to vector<8x1xf32>
    %52 = arith.maximumf %51, %50 : vector<8x1xf32>
    %53 = vector.broadcast %cst_23 : f32 to vector<8x1xf32>
    %54 = arith.minimumf %53, %52 : vector<8x1xf32>
    %cst_24 = arith.constant 0.000000e+00 : f32
    %55 = vector.broadcast %cst_24 : f32 to vector<8x1xf32>
    %56 = arith.subf %55, %54 : vector<8x1xf32>
    %cst_25 = arith.constant 0.000000e+00 : f32
    %57 = vector.broadcast %cst_25 : f32 to vector<8x1xf32>
    %58 = arith.maximumf %56, %57 : vector<8x1xf32>
    %59 = math.absf %56 : vector<8x1xf32>
    %cst_26 = arith.constant 0.000000e+00 : f32
    %60 = vector.broadcast %cst_26 : f32 to vector<8x1xf32>
    %61 = arith.subf %60, %59 : vector<8x1xf32>
    %62 = math.exp %61 : vector<8x1xf32>
    %63 = math.log1p %62 : vector<8x1xf32>
    %64 = arith.addf %58, %63 : vector<8x1xf32>
    %cst_27 = arith.constant 6.400000e+01 : f32
    %65 = vector.broadcast %cst_27 : f32 to vector<8x1xf32>
    %66 = arith.mulf %65, %36 : vector<8x1xf32>
    %67 = vector.broadcast %7 : f32 to vector<8x1xf32>
    %68 = arith.subf %66, %67 : vector<8x1xf32>
    %cst_28 = arith.constant -6.400000e+01 : f32
    %cst_29 = arith.constant 6.400000e+01 : f32
    %69 = vector.broadcast %cst_28 : f32 to vector<8x1xf32>
    %70 = arith.maximumf %69, %68 : vector<8x1xf32>
    %71 = vector.broadcast %cst_29 : f32 to vector<8x1xf32>
    %72 = arith.minimumf %71, %70 : vector<8x1xf32>
    %cst_30 = arith.constant 0.000000e+00 : f32
    %73 = vector.broadcast %cst_30 : f32 to vector<8x1xf32>
    %74 = arith.maximumf %72, %73 : vector<8x1xf32>
    %75 = math.absf %72 : vector<8x1xf32>
    %cst_31 = arith.constant 0.000000e+00 : f32
    %76 = vector.broadcast %cst_31 : f32 to vector<8x1xf32>
    %77 = arith.subf %76, %75 : vector<8x1xf32>
    %78 = math.exp %77 : vector<8x1xf32>
    %79 = math.log1p %78 : vector<8x1xf32>
    %80 = arith.addf %74, %79 : vector<8x1xf32>
    %cst_32 = arith.constant 1.000000e+00 : f32
    %81 = vector.broadcast %cst_32 : f32 to vector<8x1xf32>
    %82 = arith.mulf %80, %81 : vector<8x1xf32>
    %83 = arith.subf %64, %82 : vector<8x1xf32>
    %cst_33 = arith.constant 0.000000e+00 : f32
    %84 = vector.broadcast %cst_33 : f32 to vector<8x1xf32>
    %85 = arith.select %44, %83, %84 : vector<8x1xi1>, vector<8x1xf32>
    %c0_i32_34 = arith.constant 0 : i32
    %86 = arith.cmpi eq, %arg1, %c0_i32_34 : i32
    %87 = arith.extui %86 : i1 to i32
    %c0_i32_35 = arith.constant 0 : i32
    %88 = arith.cmpi ne, %87, %c0_i32_35 : i32
    scf.if %88 {
      %c16_i32 = arith.constant 16 : i32
      %92 = vector.broadcast %c16_i32 : i32 to vector<8x128xi32>
      %93 = arith.cmpi slt, %30, %92 : vector<8x128xi32>
      %cst_38 = arith.constant 0.000000e+00 : f32
      %94 = vector.broadcast %cst_38 : f32 to vector<8x128xf32>
      %95 = arith.select %93, %26, %94 : vector<8x128xi1>, vector<8x128xf32>
      %c0_39 = arith.constant 0 : index
      %c0_40 = arith.constant 0 : index
      %96 = vector.load %arg7[%c0_39, %c0_40] : memref<8x1xf32, #tpu.memory_space<vmem>>, vector<8x1xf32>
      %cst_41 = arith.constant dense<0.000000e+00> : vector<8xf32>
      %97 = vector.multi_reduction <add>, %95, %cst_41 [1] : vector<8x128xf32> to vector<8xf32>
      %98 = vector.shape_cast %97 : vector<8xf32> to vector<8x1xf32>
      %99 = arith.addf %98, %85 : vector<8x1xf32>
      %100 = arith.addf %96, %99 : vector<8x1xf32>
      %c0_42 = arith.constant 0 : index
      %c0_43 = arith.constant 0 : index
      %101 = vector.load %arg7[%c0_42, %c0_43] : memref<8x1xf32, #tpu.memory_space<vmem>>, vector<8x1xf32>
      tpu.vector_store %arg7[%c0_42, %c0_43], %100 {strides = array<i32>} : memref<8x1xf32, #tpu.memory_space<vmem>>, vector<8x1xf32>,
    } else {
    }
    %c0_i32_36 = arith.constant 0 : i32
    %89 = arith.cmpi ne, %arg1, %c0_i32_36 : i32
    %90 = arith.extui %89 : i1 to i32
    %c0_i32_37 = arith.constant 0 : i32
    %91 = arith.cmpi ne, %90, %c0_i32_37 : i32
    scf.if %91 {
      %c0_38 = arith.constant 0 : index
      %c0_39 = arith.constant 0 : index
      %92 = vector.load %arg7[%c0_38, %c0_39] : memref<8x1xf32, #tpu.memory_space<vmem>>, vector<8x1xf32>
      %cst_40 = arith.constant dense<0.000000e+00> : vector<8xf32>
      %93 = vector.multi_reduction <add>, %26, %cst_40 [1] : vector<8x128xf32> to vector<8xf32>
      %94 = vector.shape_cast %93 : vector<8xf32> to vector<8x1xf32>
      %95 = arith.addf %94, %85 : vector<8x1xf32>
      %96 = arith.addf %92, %95 : vector<8x1xf32>
      %c0_41 = arith.constant 0 : index
      %c0_42 = arith.constant 0 : index
      %97 = vector.load %arg7[%c0_41, %c0_42] : memref<8x1xf32, #tpu.memory_space<vmem>>, vector<8x1xf32>
      tpu.vector_store %arg7[%c0_41, %c0_42], %96 {strides = array<i32>} : memref<8x1xf32, #tpu.memory_space<vmem>>, vector<8x1xf32>,
    } else {
    }
    return
  }
  func.func @transform_0(%arg0: i32, %arg1: i32) -> (i32, i32) {
    %c0_i32 = arith.constant 0 : i32
    %c0_i32_0 = arith.constant 0 : i32
    return %arg0, %c0_i32 : i32, i32
  }
  func.func @transform_1(%arg0: i32, %arg1: i32) -> (i32, i32) {
    %c0_i32 = arith.constant 0 : i32
    %c0_i32_0 = arith.constant 0 : i32
    return %c0_i32, %arg1 : i32, i32
  }
  func.func @transform_2(%arg0: i32, %arg1: i32) -> (i32, i32) {
    %c0_i32 = arith.constant 0 : i32
    %c0_i32_0 = arith.constant 0 : i32
    %c0_i32_1 = arith.constant 0 : i32
    return %c0_i32, %c0_i32_0 : i32, i32
  }
  func.func @transform_3(%arg0: i32, %arg1: i32) -> (i32, i32) {
    %c0_i32 = arith.constant 0 : i32
    %c0_i32_0 = arith.constant 0 : i32
    return %arg0, %c0_i32 : i32, i32
  }
  func.func @transform_4(%arg0: i32, %arg1: i32) -> (i32, i32) {
    %c0_i32 = arith.constant 0 : i32
    return %arg0, %arg1 : i32, i32
  }
  func.func @transform_5(%arg0: i32, %arg1: i32) -> (i32, i32) {
    %c0_i32 = arith.constant 0 : i32
    %c0_i32_0 = arith.constant 0 : i32
    return %arg0, %c0_i32 : i32, i32
  }
}

</mosaic_0001>

<llo_original>
// kernel: tpu_custom_call.1
$region0: #{tpu_custom_call.1}
  #allocation0 [shape = 'u32[]', space=smem, size = 0x4, offset = 0x4, fixed_abs, tag = 'smem constant byte address 0x4 - core index']
  #allocation1 [shape = 'u32[72,128]{1,0:T(1,128)}', space=vmem, size = 0x9000, scoped, tag = 'internal scratch']
  #allocation2 [shape = 'f32[1,1]{1,0:T(1,128)S(6)}', space=smem, size = 0x200, scoped, tag = 'scoped memory for tpu_custom_call.1']
  %s0 = inlined_call_operand.vmem [shape: f32[8,32], index: 0, kind: input, shape index: {}]
  %s1 = inlined_call_operand.hbm [shape: f32[32,128], index: 1, kind: input, shape index: {}]
  %s2 = inlined_call_operand.<no memory space> [shape: f32[1,1], index: 2, kind: input, shape index: {}]
  %s3 = inlined_call_operand.vmem [shape: s32[8,1], index: 3, kind: input, shape index: {}]
  %s4 = inlined_call_operand.hbm [shape: f32[8,128], index: 4, kind: output, shape index: {0}]
  %s5 = inlined_call_operand.vmem [shape: f32[8,1], index: 5, kind: output, shape index: {1}]
  %6 = xla_tuple %s4, %s5
  %s7 = sld [smem:[#allocation0]]
  $region50: #{tpu_custom_call.1} parent=0
    _
  %s9 = ssub.s32 1, %s7
  %s10 = scalar_select 0, %s9, %s7
  %11 = sst [smem:[#allocation2]] %s2
  $region1: #{tpu_custom_call.1} parent=0
    #allocation3 [shape = 'u8[16384]{0}', space=vmem, size = 0x4000, scoped, tag = 'input window, operand 1, single buffered']
    #allocation4 [shape = 's32[1]{0}', space=sflag, size = 0x4, scoped, tag = 'scoped memory for tpu_custom_call.1']
    #allocation5 [shape = 's32[1]{0}', space=sflag, size = 0x4, scoped, tag = 'scoped memory for tpu_custom_call.1']
    #allocation6 [shape = 'u8[4096]{0}', space=vmem, size = 0x1000, scoped, tag = 'output window, operand 0, single buffered']
    %12 = vsyncpa [#allocation4], 0
    %13 = vsyncpa [#allocation5], 0
    // Predicated region
    $region2: #{tpu_custom_call.1} parent=1 // pred_check
      _
    $region3: #{tpu_custom_call.1} parent=1 // pred_check_branch
      %15 = sbr.rel (0) target = $region5
    $region4: #{tpu_custom_call.1} parent=1 // pred_region
      _
    $region5: #{tpu_custom_call.1} parent=1 // pred_fallthru
      _
    // Predicated region
    $region6: #{tpu_custom_call.1} parent=1 // pred_check
      _
    $region7: #{tpu_custom_call.1} parent=1 // pred_check_branch
      %17 = sbr.rel (0) target = $region9
    $region8: #{tpu_custom_call.1} parent=1 // pred_region
      %19 = vsyncadd [#allocation4], 0
      %s20 = sshll.u32 %s1, 4
      %s21 = int_to_ptr.hbm [resolvable:$true] %s20
      %s22 = sshll.u32 [#allocation3], 4
      %s23 = int_to_ptr.vmem [resolvable:$true] %s22
      %28 = dma.hbm_to_vmem [thread:$0]  %s21, 512, %s23, [#allocation4], 128, 128, 8
    $region9: #{tpu_custom_call.1} parent=1 // pred_fallthru
      _
    // Predicated region
    $region10: #{tpu_custom_call.1} parent=1 // pred_check
      _
    $region11: #{tpu_custom_call.1} parent=1 // pred_check_branch
      %30 = sbr.rel (0) target = $region13
    $region12: #{tpu_custom_call.1} parent=1 // pred_region
      _
    $region13: #{tpu_custom_call.1} parent=1 // pred_fallthru
      _
    // Predicated region
    $region14: #{tpu_custom_call.1} parent=1 // pred_check
      _
    $region15: #{tpu_custom_call.1} parent=1 // pred_check_branch
      %32 = sbr.rel (0) target = $region17
    $region16: #{tpu_custom_call.1} parent=1 // pred_region
      _
    $region17: #{tpu_custom_call.1} parent=1 // pred_fallthru
      _
    // Predicated region
    $region18: #{tpu_custom_call.1} parent=1 // pred_check
      _
    $region19: #{tpu_custom_call.1} parent=1 // pred_check_branch
      %34 = sbr.rel (0) target = $region21
    $region20: #{tpu_custom_call.1} parent=1 // pred_region
      %36 = dma.done [#allocation4], 512
    $region21: #{tpu_custom_call.1} parent=1 // pred_fallthru
      _
    %p37 = scmp.eq.s32.totalorder 0, 0
    // Predicated region
    $region22: #{tpu_custom_call.1} parent=1 // pred_check
      %p38 = pneg %p37
    $region23: #{tpu_custom_call.1} parent=1 // pred_check_branch
      %40 = sbr.rel (%p38) target = $region25
    $region24: #{tpu_custom_call.1} parent=1 // pred_region
      %vm41 = vcmask 7168
      %42 = vst.msk [vmem:[%s5] sm:$0xff] %vm41, 0.0
    $region25: #{tpu_custom_call.1} parent=1 // pred_fallthru
      _
    %v43 = vld [vmem:[%s0] sm:$0xff]
    %v44 = vld [vmem:[#allocation3] sm:$0xff]
    %v45 = vld [vmem:[#allocation3 + $0x8] sm:$0xff]
    %v46 = vld [vmem:[#allocation3 + $0x10] sm:$0xff]
    %v47 = vld [vmem:[#allocation3 + $0x18] sm:$0xff]
    %vm48 = vcmask 261120
    %v50 = vsel %vm48, %v43, 0
    %52 = vmatpush.msra.mxu0 0.0
    %53 = vmatpush.msra.mxu0 0.0
    %54 = vmatpush.msra.mxu0 0.0
    %55 = vmatpush.msra.mxu0 0.0
    %56 = vmatpush.msra.mxu0 0.0
    %57 = vmatpush.msra.mxu0 0.0
    %58 = vmatpush.msra.mxu0 0.0
    %59 = vmatpush.msra.mxu0 0.0
    %60 = vmatpush.msra.mxu0 0.0
    %61 = vmatpush.msra.mxu0 0.0
    %62 = vmatpush.msra.mxu0 0.0
    %63 = vmatpush.msra.mxu0 0.0
    %64 = vmatpush.msra.mxu0 %v47
    %65 = vmatpush.msra.mxu0 %v46
    %66 = vmatpush.msra.mxu0 %v45
    %67 = vmatpush.msra.mxu0 %v44
    %68 = vmatmul.f32.gmra.mxu0 %v50
    %v69 = vpop.f32.mrf.mxu0
    %v70 = vadd.f32 0.0, %v69
    %71 = vdwg.mxu0
    %72 = vst [vmem:[#allocation6] sm:$0xff] %v70
    %s73 = sld [smem:[#allocation2]]
    %v74 = vld [vmem:[%s3] sm:$0xff]
    %v75 = vmul.f32 %v70, 64.0
    %v76 = vstv %s73
    %v77 = vsub.f32 %v75, %v76
    %v78 = vmax.f32 %v77, -64.0
    %v79 = vmin.f32 %v78, 64.0
    %v80 = vmax.f32 %v79, 0.0
    %v81 = vand.u32 2147483647, %v79
    %v82 = vsub.f32 0.0, %v81
    %v83 = vmul.f32 %v82, 1.442695
    %v84 = vpow.pop %v83
    %v85 = vadd.f32 %v84, 1.0
    %v86 = vlog2.pop %v85
    %v87 = vmul.f32 %v86, 0.6931472
    %v88 = vmul.f32 -0.5, %v84
    %v89 = vadd.f32 %v88, 1.0
    %v90 = vmul.f32 %v89, %v84
    %v91 = vand.u32 2147483647, %v84
    %vm92 = vcmp.lt.f32.partialorder %v91, 0.0004427343
    %v93 = vsel %vm92, %v90, %v87
    %v94 = vadd.f32 %v80, %v93
    %s95 = smul.u32 0, 128
    %v96 = vlaneseq
    %v97 = vand.u32 %v96, 127
    %v98 = vstv %s95
    %v99 = vadd.s32 %v98, %v97
    %100 = vset.pattern.permute.xlu0 0
    %101 = vperm.xlu0 %100, %v74
    %v102 = vpop.permute.xlu0 %101
    %vm103 = vcmp.eq.s32.totalorder %v99, %v102
    %v104 = vsel %vm103, %v70, 0.0
    %105 = vadd.xlane.f32.xlu0 %v104
    %v106 = vpop.xlane.xlu0 %105
    %vm107 = vcmp.ge.s32.totalorder %v74, %v98
    %s108 = sadd.s32 0, 1
    %s109 = smul.u32 %s108, 128
    %v110 = vstv %s109
    %vm111 = vcmp.lt.s32.totalorder %v74, %v110
    %vm112 = vmand %vm107, %vm111
    %v113 = vsub.f32 %v106, 0.4
    %v114 = vmul.f32 %v113, 64.0
    %v115 = vsub.f32 %v114, %v76
    %v116 = vmax.f32 %v115, -64.0
    %v117 = vmin.f32 %v116, 64.0
    %v118 = vsub.f32 0.0, %v117
    %v119 = vmax.f32 %v118, 0.0
    %v120 = vand.u32 2147483647, %v118
    %v121 = vsub.f32 0.0, %v120
    %v122 = vmul.f32 %v121, 1.442695
    %v123 = vpow.pop %v122
    %v124 = vadd.f32 %v123, 1.0
    %v125 = vlog2.pop %v124
    %v126 = vmul.f32 %v125, 0.6931472
    %v127 = vmul.f32 -0.5, %v123
    %v128 = vadd.f32 %v127, 1.0
    %v129 = vmul.f32 %v128, %v123
    %v130 = vand.u32 2147483647, %v123
    %vm131 = vcmp.lt.f32.partialorder %v130, 0.0004427343
    %v132 = vsel %vm131, %v129, %v126
    %v133 = vadd.f32 %v119, %v132
    %v134 = vmul.f32 %v106, 64.0
    %v135 = vsub.f32 %v134, %v76
    %v136 = vmax.f32 %v135, -64.0
    %v137 = vmin.f32 %v136, 64.0
    %v138 = vmax.f32 %v137, 0.0
    %v139 = vand.u32 2147483647, %v137
    %v140 = vsub.f32 0.0, %v139
    %v141 = vmul.f32 %v140, 1.442695
    %v142 = vpow.pop %v141
    %v143 = vadd.f32 %v142, 1.0
    %v144 = vlog2.pop %v143
    %v145 = vmul.f32 %v144, 0.6931472
    %v146 = vmul.f32 -0.5, %v142
    %v147 = vadd.f32 %v146, 1.0
    %v148 = vmul.f32 %v147, %v142
    %v149 = vand.u32 2147483647, %v142
    %vm150 = vcmp.lt.f32.partialorder %v149, 0.0004427343
    %v151 = vsel %vm150, %v148, %v145
    %v152 = vadd.f32 %v138, %v151
    %v153 = vsub.f32 %v133, %v152
    %v154 = vsel %vm112, %v153, 0.0
    // Predicated region
    $region26: #{tpu_custom_call.1} parent=1 // pred_check
      %p155 = pneg %p37
    $region27: #{tpu_custom_call.1} parent=1 // pred_check_branch
      %157 = sbr.rel (%p155) target = $region29
    $region28: #{tpu_custom_call.1} parent=1 // pred_region
      %vm158 = vcmp.lt.s32.totalorder %v99, 16
      %v159 = vsel %vm158, %v94, 0.0
      %v160 = vld [vmem:[%s5] sm:$0xff]
      %161 = vadd.xlane.f32.xlu0 %v159
      %v162 = vpop.xlane.xlu0 %161
      %v163 = vadd.f32 %v162, %v154
      %v164 = vadd.f32 %v160, %v163
      %vm165 = vcmask 7168
      %166 = vst.msk [vmem:[%s5] sm:$0xff] %vm165, %v164
    $region29: #{tpu_custom_call.1} parent=1 // pred_fallthru
      _
    %p167 = scmp.ne.s32.totalorder 0, 0
    // Predicated region
    $region30: #{tpu_custom_call.1} parent=1 // pred_check
      %p168 = pneg %p167
    $region31: #{tpu_custom_call.1} parent=1 // pred_check_branch
      %170 = sbr.rel (%p168) target = $region33
    $region32: #{tpu_custom_call.1} parent=1 // pred_region
      %v171 = vld [vmem:[%s5] sm:$0xff]
      %172 = vadd.xlane.f32.xlu0 %v94
      %v173 = vpop.xlane.xlu0 %172
      %v174 = vadd.f32 %v173, %v154
      %v175 = vadd.f32 %v171, %v174
      %vm176 = vcmask 7168
      %177 = vst.msk [vmem:[%s5] sm:$0xff] %vm176, %v175
    $region33: #{tpu_custom_call.1} parent=1 // pred_fallthru
      _
    // Predicated region
    $region34: #{tpu_custom_call.1} parent=1 // pred_check
      _
    $region35: #{tpu_custom_call.1} parent=1 // pred_check_branch
      %179 = sbr.rel (0) target = $region37
    $region36: #{tpu_custom_call.1} parent=1 // pred_region
      %181 = vsyncadd [#allocation5], 0
      %s183 = sshll.u32 [#allocation6], 4
      %s184 = int_to_ptr.vmem [resolvable:$true] %s183
      %s185 = sshll.u32 %s4, 4
      %s186 = int_to_ptr.hbm [resolvable:$true] %s185
      %188 = dma.vmem_to_hbm [thread:$0]  %s184, 128, %s186, [#allocation5]
    $region37: #{tpu_custom_call.1} parent=1 // pred_fallthru
      _
    // Predicated region
    $region38: #{tpu_custom_call.1} parent=1 // pred_check
      _
    $region39: #{tpu_custom_call.1} parent=1 // pred_check_branch
      %190 = sbr.rel (0) target = $region41
    $region40: #{tpu_custom_call.1} parent=1 // pred_region
      _
    $region41: #{tpu_custom_call.1} parent=1 // pred_fallthru
      _
    // Predicated region
    $region42: #{tpu_custom_call.1} parent=1 // pred_check
      _
    $region43: #{tpu_custom_call.1} parent=1 // pred_check_branch
      %192 = sbr.rel (0) target = $region45
    $region44: #{tpu_custom_call.1} parent=1 // pred_region
      %194 = dma.done [#allocation5], 128
    $region45: #{tpu_custom_call.1} parent=1 // pred_fallthru
      _
    // Predicated region
    $region46: #{tpu_custom_call.1} parent=1 // pred_check
      _
    $region47: #{tpu_custom_call.1} parent=1 // pred_check_branch
      %196 = sbr.rel (0) target = $region49
    $region48: #{tpu_custom_call.1} parent=1 // pred_region
      _
    $region49: #{tpu_custom_call.1} parent=1 // pred_fallthru
      _
    %197 = vsyncpa [#allocation4], 1
    %198 = vsyncpa [#allocation5], 1

</llo_original>
